<compile_context>
chip_gen: v7x
topology: tpu7x:2x2x1
jax: 0.10.0
libtpu: 0.0.40
codegen_flags: <defaults>
</compile_context>

<pallas_src>
import functools

import jax
import jax.numpy as jnp
from jax.experimental import pallas as pl
from jax.experimental.pallas import tpu as pltpu


_TARGET_TILE_BYTES = 4 * 1024 * 1024   # target size of one logits tile
_MIN_TSUB = 64                         # smallest acceptable divisor tile (64*128 px)


def _choose_tiling(hw, c, itemsize):
    """Return (tsub, hw_padded): tile = (C, tsub, 128) logits, hw_padded % (tsub*128)==0."""
    hw128 = -(-hw // 128)                                   # ceil(hw / 128)
    cap = (_TARGET_TILE_BYTES // (c * 128 * itemsize)) // 8 * 8
    cap = max(8, cap)

    if hw128 <= cap:
        # one tile per image (rounded up to 8 sublanes / 128 lanes)
        tsub = -(-hw128 // 8) * 8
        return tsub, tsub * 128

    # prefer a tile that divides HW exactly -> no padding copy in HBM
    if hw % 128 == 0:
        t = cap
        while t >= _MIN_TSUB:
            if hw128 % t == 0:
                return t, hw
            t -= 8

    # fall back: pad HW up to a multiple of the target tile and mask in-kernel
    tsub = cap
    hwp = -(-hw // (tsub * 128)) * (tsub * 128)
    return tsub, hwp


def _ce_kernel(logits_ref, tgt_ref, out_ref, *, hw, tile_px, masked):
    """One (batch, hw-tile) grid cell: per-pixel CE loss summed into an (8,128) partial."""
    tsub = logits_ref.shape[2]

    x = logits_ref[0].astype(jnp.float32)                  # (C, TSUB, 128)
    t = tgt_ref[0]                                         # (TSUB, 128) int32

    # numerically stable log-sum-exp over the class (leading) axis
    m = jnp.max(x, axis=0)                                 # (TSUB, 128)
    lse = m + jnp.log(jnp.sum(jnp.exp(x - m), axis=0))     # (TSUB, 128)

    # gather logit of the target class via one-hot select over class planes
    # TODO(synk): out-of-range targets (e.g. ignore_index=-100) are not
    # rejected/ignored like PyTorch NLLLoss; they contribute picked == 0.
    cls = jax.lax.broadcasted_iota(jnp.int32, x.shape, 0)  # (C, TSUB, 128)
    picked = jnp.sum(jnp.where(cls == t, x, 0.0), axis=0)  # (TSUB, 128)

    loss = lse - picked                                    # (TSUB, 128)

    if masked:
        j = pl.program_id(1)
        sub_i = jax.lax.broadcasted_iota(jnp.int32, (tsub, 128), 0)
        lane_i = jax.lax.broadcasted_iota(jnp.int32, (tsub, 128), 1)
        pix = j * tile_px + sub_i * 128 + lane_i
        loss = jnp.where(pix < hw, loss, 0.0)

    # lane-dense partial sum: collapse sublanes, keep 128 lane partials,
    # write a dense (8, 128) block (row 0 carries the data, rows 1..7 are zero).
    row = jnp.sum(loss, axis=0, keepdims=True)             # (1, 128)
    sub8 = jax.lax.broadcasted_iota(jnp.int32, (8, 128), 0)
    out_ref[...] = jnp.where(sub8 == 0, row, 0.0)


def cross_entropy_loss_2d(outputs, targets):
    """outputs: (N, C, H, W) float; targets: (N, 1, H, W) or (N, H, W) int."""
    n, c, h, w = outputs.shape
    hw = h * w
    itemsize = jnp.dtype(outputs.dtype).itemsize

    tsub, hwp = _choose_tiling(hw, c, itemsize)
    tile_px = tsub * 128
    num_j = hwp // tile_px
    hw128p = hwp // 128
    masked = hwp != hw

    # free, row-major views of the native NCHW data (no transpose)
    logits = outputs.reshape(n, c, hw)
    tgt = targets.reshape(n, hw).astype(jnp.int32)
    if masked:
        logits = jnp.pad(logits, ((0, 0), (0, 0), (0, hwp - hw)))
        tgt = jnp.pad(tgt, ((0, 0), (0, hwp - hw)))
    logits = logits.reshape(n, c, hw128p, 128)
    tgt = tgt.reshape(n, hw128p, 128)

    kernel = functools.partial(_ce_kernel, hw=hw, tile_px=tile_px, masked=masked)

    partials = pl.pallas_call(
        kernel,
        out_shape=jax.ShapeDtypeStruct((n * num_j * 8, 128), jnp.float32),
        grid_spec=pltpu.PrefetchScalarGridSpec(
            num_scalar_prefetch=0,
            grid=(n, num_j),
            in_specs=[
                pl.BlockSpec((1, c, tsub, 128), lambda i, j: (i, 0, j, 0)),
                pl.BlockSpec((1, tsub, 128), lambda i, j: (i, j, 0)),
            ],
            out_specs=pl.BlockSpec((8, 128), lambda i, j: (i * num_j + j, 0)),
        ),
        compiler_params=pltpu.CompilerParams(
            dimension_semantics=("parallel", "parallel"),
            vmem_limit_bytes=32 * 1024 * 1024,
        ),
    )(logits, tgt)

    return jnp.sum(partials) / float(n * hw)


def _reference_loss(outputs, targets):
    """Pure-JAX reference for correctness check."""
    n, c, h, w = outputs.shape
    logits = jnp.transpose(outputs, (0, 2, 3, 1)).reshape(-1, c).astype(jnp.float32)
    t = targets.reshape(-1).astype(jnp.int32)
    logp = jax.nn.log_softmax(logits, axis=-1)
    return -jnp.mean(jnp.take_along_axis(logp, t[:, None], axis=-1))


if __name__ == "__main__":
    key = jax.random.PRNGKey(0)
    k1, k2 = jax.random.split(key)

    N, C, H, W = 2, 4, 16, 16
    outputs = jax.random.normal(k1, (N, C, H, W), dtype=jnp.float32)
    targets = jax.random.randint(k2, (N, 1, H, W), 0, C, dtype=jnp.int32)

    loss = cross_entropy_loss_2d(outputs, targets)
    loss = jax.block_until_ready(loss)

    ref = jax.block_until_ready(_reference_loss(outputs, targets))
    assert jnp.isfinite(loss), "loss is not finite"
    assert jnp.allclose(loss, ref, rtol=1e-5, atol=1e-5), (loss, ref)

    print("KERNEL_OK")
</pallas_src>

<mosaic_0001>
module attributes {stable_mosaic.version = 11 : i64} {
  func.func @_ce_kernel(%arg0: i32, %arg1: i32, %arg2: memref<1x4x8x128xf32, #tpu.memory_space<vmem>>, %arg3: memref<1x8x128xi32, #tpu.memory_space<vmem>>, %arg4: memref<8x128xf32, #tpu.memory_space<vmem>>) attributes {dimension_semantics = [#tpu.dimension_semantics<parallel>, #tpu.dimension_semantics<parallel>], iteration_bounds = array<i64: 2, 1>, scalar_prefetch = 0 : i64, scratch_operands = 0 : i64, tpu.core_type = #tpu.core_type<tc>, window_params = [{transform_indices = @transform_0, window_bounds = array<i64: 1, 4, 8, 128>}, {transform_indices = @transform_1, window_bounds = array<i64: 1, 8, 128>}, {transform_indices = @transform_2, window_bounds = array<i64: 8, 128>}]} {
    %c0 = arith.constant 0 : index
    %c0_0 = arith.constant 0 : index
    %c0_1 = arith.constant 0 : index
    %c0_2 = arith.constant 0 : index
    %0 = vector.load %arg2[%c0, %c0_0, %c0_1, %c0_2] : memref<1x4x8x128xf32, #tpu.memory_space<vmem>>, vector<1x4x8x128xf32>
    %1 = vector.shape_cast %0 : vector<1x4x8x128xf32> to vector<4x8x128xf32>
    %c0_3 = arith.constant 0 : index
    %c0_4 = arith.constant 0 : index
    %c0_5 = arith.constant 0 : index
    %2 = vector.load %arg3[%c0_3, %c0_4, %c0_5] : memref<1x8x128xi32, #tpu.memory_space<vmem>>, vector<1x8x128xi32>
    %3 = vector.shape_cast %2 : vector<1x8x128xi32> to vector<8x128xi32>
    %cst = arith.constant dense<0xFF800000> : vector<8x128xf32>
    %4 = vector.multi_reduction <maximumf>, %1, %cst [0] : vector<4x8x128xf32> to vector<8x128xf32>
    %5 = vector.shape_cast %4 : vector<8x128xf32> to vector<1x8x128xf32>
    %6 = vector.broadcast %5 : vector<1x8x128xf32> to vector<4x8x128xf32>
    %7 = arith.subf %1, %6 : vector<4x8x128xf32>
    %8 = math.exp %7 : vector<4x8x128xf32>
    %cst_6 = arith.constant dense<0.000000e+00> : vector<8x128xf32>
    %9 = vector.multi_reduction <add>, %8, %cst_6 [0] : vector<4x8x128xf32> to vector<8x128xf32>
    %10 = math.log %9 : vector<8x128xf32>
    %11 = arith.addf %4, %10 : vector<8x128xf32>
    %12 = tpu.iota {dimensions = array<i32: 0>} : vector<4x8x128xi32>
    %13 = vector.shape_cast %3 : vector<8x128xi32> to vector<1x8x128xi32>
    %14 = vector.broadcast %13 : vector<1x8x128xi32> to vector<4x8x128xi32>
    %15 = arith.cmpi eq, %12, %14 : vector<4x8x128xi32>
    %cst_7 = arith.constant 0.000000e+00 : f32
    %16 = vector.broadcast %cst_7 : f32 to vector<4x8x128xf32>
    %17 = arith.select %15, %1, %16 : vector<4x8x128xi1>, vector<4x8x128xf32>
    %cst_8 = arith.constant dense<0.000000e+00> : vector<8x128xf32>
    %18 = vector.multi_reduction <add>, %17, %cst_8 [0] : vector<4x8x128xf32> to vector<8x128xf32>
    %19 = arith.subf %11, %18 : vector<8x128xf32>
    %20 = tpu.iota {dimensions = array<i32: 0>} : vector<8x128xi32>
    %21 = tpu.iota {dimensions = array<i32: 1>} : vector<8x128xi32>
    %c1024_i32 = arith.constant 1024 : i32
    %22 = arith.muli %arg1, %c1024_i32 : i32
    %c128_i32 = arith.constant 128 : i32
    %23 = vector.broadcast %c128_i32 : i32 to vector<8x128xi32>
    %24 = arith.muli %20, %23 : vector<8x128xi32>
    %25 = vector.broadcast %22 : i32 to vector<8x128xi32>
    %26 = arith.addi %25, %24 : vector<8x128xi32>
    %27 = arith.addi %26, %21 : vector<8x128xi32>
    %c256_i32 = arith.constant 256 : i32
    %28 = vector.broadcast %c256_i32 : i32 to vector<8x128xi32>
    %29 = arith.cmpi slt, %27, %28 : vector<8x128xi32>
    %cst_9 = arith.constant 0.000000e+00 : f32
    %30 = vector.broadcast %cst_9 : f32 to vector<8x128xf32>
    %31 = arith.select %29, %19, %30 : vector<8x128xi1>, vector<8x128xf32>
    %cst_10 = arith.constant dense<0.000000e+00> : vector<128xf32>
    %32 = vector.multi_reduction <add>, %31, %cst_10 [0] : vector<8x128xf32> to vector<128xf32>
    %33 = vector.shape_cast %32 : vector<128xf32> to vector<1x128xf32>
    %34 = tpu.iota {dimensions = array<i32: 0>} : vector<8x128xi32>
    %c0_i32 = arith.constant 0 : i32
    %35 = vector.broadcast %c0_i32 : i32 to vector<8x128xi32>
    %36 = arith.cmpi eq, %34, %35 : vector<8x128xi32>
    %cst_11 = arith.constant 0.000000e+00 : f32
    %37 = vector.shape_cast %33 : vector<1x128xf32> to vector<1x128xf32>
    %38 = vector.broadcast %37 : vector<1x128xf32> to vector<8x128xf32>
    %39 = vector.broadcast %cst_11 : f32 to vector<8x128xf32>
    %40 = arith.select %36, %38, %39 : vector<8x128xi1>, vector<8x128xf32>
    %c0_12 = arith.constant 0 : index
    %c0_13 = arith.constant 0 : index
    %41 = vector.load %arg4[%c0_12, %c0_13] : memref<8x128xf32, #tpu.memory_space<vmem>>, vector<8x128xf32>
    tpu.vector_store %arg4[%c0_12, %c0_13], %40 {strides = array<i32>} : memref<8x128xf32, #tpu.memory_space<vmem>>, vector<8x128xf32>,
    return
  }
  func.func @transform_0(%arg0: i32, %arg1: i32) -> (i32, i32, i32, i32) {
    %c0_i32 = arith.constant 0 : i32
    %c0_i32_0 = arith.constant 0 : i32
    %c0_i32_1 = arith.constant 0 : i32
    return %arg0, %c0_i32, %arg1, %c0_i32_0 : i32, i32, i32, i32
  }
  func.func @transform_1(%arg0: i32, %arg1: i32) -> (i32, i32, i32) {
    %c0_i32 = arith.constant 0 : i32
    %c0_i32_0 = arith.constant 0 : i32
    return %arg0, %arg1, %c0_i32 : i32, i32, i32
  }
  func.func @transform_2(%arg0: i32, %arg1: i32) -> (i32, i32) {
    %c1_i32 = arith.constant 1 : i32
    %0 = arith.muli %arg0, %c1_i32 : i32
    %1 = arith.addi %0, %arg1 : i32
    %c0_i32 = arith.constant 0 : i32
    %c0_i32_0 = arith.constant 0 : i32
    return %1, %c0_i32 : i32, i32
  }
}

</mosaic_0001>

<llo_original>
// kernel: tpu_custom_call.1
$region0: #{tpu_custom_call.1}
  #allocation0 [shape = 'u32[]', space=smem, size = 0x4, offset = 0x4, fixed_abs, tag = 'smem constant byte address 0x4 - core index']
  #allocation1 [shape = 'u32[144,128]{1,0:T(1,128)}', space=vmem, size = 0x12000, scoped, tag = 'internal scratch']
  %s0 = inlined_call_operand.hbm [shape: f32[2,4,8,128], index: 0, kind: input, shape index: {}]
  %s1 = inlined_call_operand.hbm [shape: s32[2,8,128], index: 1, kind: input, shape index: {}]
  %s2 = inlined_call_operand.hbm [shape: f32[16,128], index: 2, kind: output, shape index: {}]
  %s3 = sld [smem:[#allocation0]]
  $region49: #{tpu_custom_call.1} parent=0
    _
  %s5 = ssub.s32 1, %s3
  %s6 = scalar_select 0, %s5, %s3
  $region1: #{tpu_custom_call.1} parent=0
    #allocation2 [shape = 'u8[32768]{0}', space=vmem, size = 0x8000, scoped, tag = 'input window, operand 0']
    #allocation3 [shape = 's32[2]{0}', space=sflag, size = 0x8, scoped, tag = 'scoped memory for tpu_custom_call.1']
    #allocation4 [shape = 's32[2]{0}', space=sflag, size = 0x8, scoped, tag = 'scoped memory for tpu_custom_call.1']
    #allocation5 [shape = 'u8[8192]{0}', space=vmem, size = 0x2000, scoped, tag = 'input window, operand 1']
    #allocation6 [shape = 's32[2]{0}', space=sflag, size = 0x8, scoped, tag = 'scoped memory for tpu_custom_call.1']
    #allocation7 [shape = 'u8[8192]{0}', space=vmem, size = 0x2000, scoped, tag = 'output window, operand 0']
    %7 = vsyncpa [#allocation3], 0
    %s8 = scalar_lea.sflag [#allocation3], 1
    %9 = vsyncpa %s8, 0
    %10 = vsyncpa [#allocation6], 0
    %s11 = scalar_lea.sflag [#allocation6], 1
    %12 = vsyncpa %s11, 0
    %13 = vsyncpa [#allocation4], 0
    %s14 = scalar_lea.sflag [#allocation4], 1
    %15 = vsyncpa %s14, 0
    loop: start=0, step=1, limit=4
    $region2: #{tpu_custom_call.1} parent=1 // loop_pre_header
      _
    $region3: #{tpu_custom_call.1} parent=1 // loop_header
      %s17 = sphi 0, %s21
      %p18 = scmp.ge.s32.totalorder %s17, 4
      %s24 = sphi 0, %s36
      %s25 = sphi 0, %s32
      %s26 = sphi 0, %s24
      %s27 = sphi 0, %s25
      %s28 = sphi 0, %s26
      %s29 = sphi 0, %s27
      %s41 = sphi 0, %s43
      %s44 = sphi 0, %s41
      %s45 = sphi 0, %s44
      %s61 = sphi 0, %s45
      %s69 = sphi 0, %s71
      %s72 = sphi 0, %s69
      %s73 = sphi 0, %s72
      %s89 = sphi 0, %s73
      %s97 = sphi 0, %s99
      %s100 = sphi 0, %s97
      %s101 = sphi 0, %s100
      %s117 = sphi 0, %s101
    $region4: #{tpu_custom_call.1} parent=1 // loop_header_branch
      %20 = sbr.rel (%p18) target = $region8
    $region5: #{tpu_custom_call.1} parent=1 // loop_body
      %s22 = ssub.s32 %s17, 1
      %s23 = ssub.s32 %s17, 2
      %s30 = sadd.s32 1, %s25
      %p31 = scmp.ge.s32.totalorder %s30, 1
      %s32 = scalar_select %p31, 0, %s30
      %s33 = sadd.s32 1, %s24
      %s34 = scalar_select %p31, %s33, %s24
      %p35 = scmp.ge.s32.totalorder %s34, 2
      %s36 = scalar_select %p35, 0, %s34
      %s37 = ssub.s32 %s24, %s36
      %s38 = ssub.s32 %s25, %s32
      %s39 = sor.u32 %s37, %s38
      %p40 = scmp.eq.s32.totalorder %s39, 0
      %s42 = sadd.s32 %s41, 1
      %s43 = scalar_select %p40, %s41, %s42
      %p46 = pneg %p40
      %p47 = scmp.eq.s32.totalorder %s17, 1
      %p48 = por %p46, %p47
      %p49 = scmp.ne.s32.totalorder %s41, %s44
      %p50 = scmp.eq.s32.totalorder %s17, 0
      %p51 = por %p49, %p50
      %p52 = scmp.ne.s32.totalorder %s41, %s44
      %p53 = scmp.eq.s32.totalorder %s22, 1
      %p54 = por %p52, %p53
      %p55 = scmp.ne.s32.totalorder %s44, %s45
      %p56 = scmp.eq.s32.totalorder %s22, 0
      %p57 = por %p55, %p56
      %p58 = scmp.ne.s32.totalorder %s44, %s45
      %p59 = scmp.eq.s32.totalorder %s23, 1
      %p60 = por %p58, %p59
      %p62 = scmp.ne.s32.totalorder %s45, %s61
      %p63 = scmp.eq.s32.totalorder %s23, 0
      %p64 = por %p62, %p63
      %s65 = ssub.s32 %s24, %s36
      %s66 = ssub.s32 %s25, %s32
      %s67 = sor.u32 %s65, %s66
      %p68 = scmp.eq.s32.totalorder %s67, 0
      %s70 = sadd.s32 %s69, 1
      %s71 = scalar_select %p68, %s69, %s70
      %p74 = pneg %p68
      %p75 = scmp.eq.s32.totalorder %s17, 1
      %p76 = por %p74, %p75
      %p77 = scmp.ne.s32.totalorder %s69, %s72
      %p78 = scmp.eq.s32.totalorder %s17, 0
      %p79 = por %p77, %p78
      %p80 = scmp.ne.s32.totalorder %s69, %s72
      %p81 = scmp.eq.s32.totalorder %s22, 1
      %p82 = por %p80, %p81
      %p83 = scmp.ne.s32.totalorder %s72, %s73
      %p84 = scmp.eq.s32.totalorder %s22, 0
      %p85 = por %p83, %p84
      %p86 = scmp.ne.s32.totalorder %s72, %s73
      %p87 = scmp.eq.s32.totalorder %s23, 1
      %p88 = por %p86, %p87
      %p90 = scmp.ne.s32.totalorder %s73, %s89
      %p91 = scmp.eq.s32.totalorder %s23, 0
      %p92 = por %p90, %p91
      %s93 = sadd.s32 %s24, %s25
      %s94 = sadd.s32 %s36, %s32
      %s95 = ssub.s32 %s93, %s94
      %p96 = scmp.eq.s32.totalorder %s95, 0
      %s98 = sadd.s32 %s97, 1
      %s99 = scalar_select %p96, %s97, %s98
      %p102 = pneg %p96
      %p103 = scmp.eq.s32.totalorder %s17, 1
      %p104 = por %p102, %p103
      %p105 = scmp.ne.s32.totalorder %s97, %s100
      %p106 = scmp.eq.s32.totalorder %s17, 0
      %p107 = por %p105, %p106
      %p108 = scmp.ne.s32.totalorder %s97, %s100
      %p109 = scmp.eq.s32.totalorder %s22, 1
      %p110 = por %p108, %p109
      %p111 = scmp.ne.s32.totalorder %s100, %s101
      %p112 = scmp.eq.s32.totalorder %s22, 0
      %p113 = por %p111, %p112
      %p114 = scmp.ne.s32.totalorder %s100, %s101
      %p115 = scmp.eq.s32.totalorder %s23, 1
      %p116 = por %p114, %p115
      %p118 = scmp.ne.s32.totalorder %s101, %s117
      %p119 = scmp.eq.s32.totalorder %s23, 0
      %p120 = por %p118, %p119
      %p121 = scmp.le.s32.totalorder 1, %s17
      %p122 = scmp.lt.s32.totalorder %s17, 3
      %p123 = pnand %p121, %p122
      %p124 = pneg %p123
      // Predicated region
      $region9: #{tpu_custom_call.1} parent=5 // pred_check
        _
      $region10: #{tpu_custom_call.1} parent=5 // pred_check_branch
        %126 = sbr.rel (%p123) target = $region12
      $region11: #{tpu_custom_call.1} parent=5 // pred_region
        %s127 = ssub.s32 %s17, 1
      $region12: #{tpu_custom_call.1} parent=5 // pred_fallthru
        _
      %p128 = scmp.lt.s32.totalorder %s17, 2
      // Predicated region
      $region13: #{tpu_custom_call.1} parent=5 // pred_check
        %p129 = pneg %p128
      $region14: #{tpu_custom_call.1} parent=5 // pred_check_branch
        %131 = sbr.rel (%p129) target = $region16
      $region15: #{tpu_custom_call.1} parent=5 // pred_region
        // Predicated region
        $region17: #{tpu_custom_call.1} parent=15 // pred_check
          %p132 = pneg %p51
        $region18: #{tpu_custom_call.1} parent=15 // pred_check_branch
          %134 = sbr.rel (%p132) target = $region20
        $region19: #{tpu_custom_call.1} parent=15 // pred_region
          %s135 = sand.u32 %s41, 1
          %s136 = scalar_lea.sflag [#allocation3], %s135
          %s137 = sand.u32 %s41, 1
          %s138 = smul.addr %s137, 32
          %s139 = scalar_lea.vmem [#allocation2], %s138
          %s141 = ssub.s32 512, 512
          %142 = vsyncadd %s136, %s141
          %s143 = smul.addr %s24, 4
          %s144 = sadd.s32 %s25, %s143
          %s145 = smul.addr %s144, 128
          %s146 = scalar_lea.hbm %s0, %s145
          %s147 = sshll.u32 %s139, 4
          %s148 = int_to_ptr.vmem [resolvable:$true] %s147
          %153 = dma.hbm_to_vmem [thread:$0]  %s146, 512, %s148, %s136, 128, 128, 8
        $region20: #{tpu_custom_call.1} parent=15 // pred_fallthru
          _
        // Predicated region
        $region21: #{tpu_custom_call.1} parent=15 // pred_check
          %p154 = pneg %p79
        $region22: #{tpu_custom_call.1} parent=15 // pred_check_branch
          %156 = sbr.rel (%p154) target = $region24
        $region23: #{tpu_custom_call.1} parent=15 // pred_region
          %s157 = sand.u32 %s69, 1
          %s158 = scalar_lea.sflag [#allocation6], %s157
          %s159 = sand.u32 %s69, 1
          %s160 = smul.addr %s159, 8
          %s161 = scalar_lea.vmem [#allocation5], %s160
          %s163 = ssub.s32 128, 128
          %164 = vsyncadd %s158, %s163
          %s165 = sadd.s32 %s25, %s24
          %s166 = smul.addr %s165, 128
          %s167 = scalar_lea.hbm %s1, %s166
          %s169 = sshll.u32 %s161, 4
          %s170 = int_to_ptr.vmem [resolvable:$true] %s169
          %172 = dma.hbm_to_vmem [thread:$0]  %s167, 128, %s170, %s158
        $region24: #{tpu_custom_call.1} parent=15 // pred_fallthru
          _
      $region16: #{tpu_custom_call.1} parent=5 // pred_fallthru
        _
      %p173 = scmp.le.s32.totalorder 1, %s17
      %p174 = scmp.lt.s32.totalorder %s17, 3
      %p175 = pnand %p173, %p174
      %p176 = pneg %p175
      // Predicated region
      $region25: #{tpu_custom_call.1} parent=5 // pred_check
        _
      $region26: #{tpu_custom_call.1} parent=5 // pred_check_branch
        %178 = sbr.rel (%p175) target = $region28
      $region27: #{tpu_custom_call.1} parent=5 // pred_region
        %s179 = ssub.s32 %s17, 1
        %s180 = sand.u32 %s44, 1
        %s181 = scalar_lea.sflag [#allocation3], %s180
        %s182 = sand.u32 %s44, 1
        %s183 = smul.addr %s182, 32
        %s184 = scalar_lea.vmem [#allocation2], %s183
        // Predicated region
        $region29: #{tpu_custom_call.1} parent=27 // pred_check
          %p185 = pneg %p57
        $region30: #{tpu_custom_call.1} parent=27 // pred_check_branch
          %187 = sbr.rel (%p185) target = $region32
        $region31: #{tpu_custom_call.1} parent=27 // pred_region
          %188 = dma.done %s181, 512
        $region32: #{tpu_custom_call.1} parent=27 // pred_fallthru
          _
        %s189 = sand.u32 %s72, 1
        %s190 = scalar_lea.sflag [#allocation6], %s189
        %s191 = sand.u32 %s72, 1
        %s192 = smul.addr %s191, 8
        %s193 = scalar_lea.vmem [#allocation5], %s192
        // Predicated region
        $region33: #{tpu_custom_call.1} parent=27 // pred_check
          %p194 = pneg %p85
        $region34: #{tpu_custom_call.1} parent=27 // pred_check_branch
          %196 = sbr.rel (%p194) target = $region36
        $region35: #{tpu_custom_call.1} parent=27 // pred_region
          %197 = dma.done %s190, 128
        $region36: #{tpu_custom_call.1} parent=27 // pred_fallthru
          _
        %s198 = sand.u32 %s44, 1
        %s199 = scalar_lea.sflag [#allocation3], %s198
        %s200 = sand.u32 %s44, 1
        %s201 = smul.addr %s200, 32
        %s202 = scalar_lea.vmem [#allocation2], %s201
        %p203 = pneg %p57
        %p204 = pneg %p54
        %s205 = sand.u32 %s72, 1
        %s206 = scalar_lea.sflag [#allocation6], %s205
        %s207 = sand.u32 %s72, 1
        %s208 = smul.addr %s207, 8
        %s209 = scalar_lea.vmem [#allocation5], %s208
        %p210 = pneg %p85
        %p211 = pneg %p82
        %p212 = pneg %p113
        %p213 = pneg %p110
        %s214 = sand.u32 %s100, 1
        %s215 = scalar_lea.sflag [#allocation4], %s214
        %s216 = sand.u32 %s100, 1
        %s217 = smul.addr %s216, 8
        %s218 = scalar_lea.vmem [#allocation7], %s217
        %s219 = sadd.s32 %s26, %s27
        %v220 = vld [vmem:[%s184] sm:$0xff]
        %v221 = vld [vmem:[%s184 + $0x8] sm:$0xff]
        %v222 = vld [vmem:[%s184 + $0x10] sm:$0xff]
        %v223 = vld [vmem:[%s184 + $0x18] sm:$0xff]
        %v224 = vld [vmem:[%s193] sm:$0xff]
        %v225 = vmax.f32 %v220, %v221
        %v226 = vmax.f32 %v222, %v223
        %v227 = vmax.f32 %v225, %v226
        %v228 = vsub.f32 %v220, %v227
        %v229 = vsub.f32 %v221, %v227
        %v230 = vsub.f32 %v222, %v227
        %v231 = vsub.f32 %v223, %v227
        %v232 = vmul.f32 %v228, 1.442695
        %v233 = vpow.pop %v232
        %v234 = vmul.f32 %v229, 1.442695
        %v235 = vpow.pop %v234
        %v236 = vmul.f32 %v230, 1.442695
        %v237 = vpow.pop %v236
        %v238 = vmul.f32 %v231, 1.442695
        %v239 = vpow.pop %v238
        %v240 = vadd.f32 %v233, %v235
        %v241 = vadd.f32 %v240, %v237
        %v242 = vadd.f32 %v241, %v239
        %v243 = vlog2.pop %v242
        %v244 = vmul.f32 %v243, 0.6931472
        %v245 = vadd.f32 %v227, %v244
        %vm246 = vcmp.eq.s32.totalorder %v224, 0
        %vm247 = vcmp.eq.s32.totalorder %v224, 1
        %vm248 = vcmp.eq.s32.totalorder %v224, 2
        %vm249 = vcmp.eq.s32.totalorder %v224, 3
        %v250 = vsel %vm246, %v220, 0.0
        %v251 = vsel %vm247, %v221, 0.0
        %v252 = vsel %vm248, %v222, 0.0
        %v253 = vsel %vm249, %v223, 0.0
        %v254 = vadd.f32 %v250, %v251
        %v255 = vadd.f32 %v254, %v252
        %v256 = vadd.f32 %v255, %v253
        %v257 = vsub.f32 %v245, %v256
        %v258 = vlaneseq
        %v259 = vshrl.u32 %v258, 7
        %v260 = vlaneseq
        %v261 = vand.u32 %v260, 127
        %s262 = smul.u32 %s27, 1024
        %v263 = vmul.u32 %v259, 128
        %v264 = vstv %s262
        %v265 = vadd.s32 %v264, %v263
        %v266 = vadd.s32 %v265, %v261
        %vm267 = vcmp.lt.s32.totalorder %v266, 256
        %v268 = vsel %vm267, %v257, 0.0
        %v269 = vrot.slane %v268, 4
        %v270 = vadd.f32 %v268, %v269
        %v271 = vrot.slane %v270, 2
        %v272 = vadd.f32 %v270, %v271
        %v273 = vrot.slane %v272, 1
        %v274 = vadd.f32 %v272, %v273
        %vm275 = vcmp.eq.s32.totalorder %v259, 0
        %v276 = vsel %vm275, %v274, 0.0
        %277 = vst [vmem:[%s218] sm:$0xff] %v276
        %s278 = sand.u32 %s100, 1
        %s279 = scalar_lea.sflag [#allocation4], %s278
        %s280 = sand.u32 %s100, 1
        %s281 = smul.addr %s280, 8
        %s282 = scalar_lea.vmem [#allocation7], %s281
        // Predicated region
        $region37: #{tpu_custom_call.1} parent=27 // pred_check
          %p283 = pneg %p110
        $region38: #{tpu_custom_call.1} parent=27 // pred_check_branch
          %285 = sbr.rel (%p283) target = $region40
        $region39: #{tpu_custom_call.1} parent=27 // pred_region
          %s286 = sadd.s32 %s26, %s27
          %s288 = ssub.s32 128, 128
          %289 = vsyncadd %s279, %s288
          %s290 = smul.addr %s286, 128
          %s291 = scalar_lea.hbm %s2, %s290
          %s293 = sshll.u32 %s282, 4
          %s294 = int_to_ptr.vmem [resolvable:$true] %s293
          %296 = dma.vmem_to_hbm [thread:$0]  %s294, 128, %s291, %s279
        $region40: #{tpu_custom_call.1} parent=27 // pred_fallthru
          _
      $region28: #{tpu_custom_call.1} parent=5 // pred_fallthru
        _
      %p297 = scmp.le.s32.totalorder 2, %s17
      // Predicated region
      $region41: #{tpu_custom_call.1} parent=5 // pred_check
        %p298 = pneg %p297
      $region42: #{tpu_custom_call.1} parent=5 // pred_check_branch
        %300 = sbr.rel (%p298) target = $region44
      $region43: #{tpu_custom_call.1} parent=5 // pred_region
        %s301 = ssub.s32 %s17, 2
        // Predicated region
        $region45: #{tpu_custom_call.1} parent=43 // pred_check
          %p302 = pneg %p116
        $region46: #{tpu_custom_call.1} parent=43 // pred_check_branch
          %304 = sbr.rel (%p302) target = $region48
        $region47: #{tpu_custom_call.1} parent=43 // pred_region
          %s305 = sand.u32 %s101, 1
          %s306 = scalar_lea.sflag [#allocation4], %s305
          %s307 = sand.u32 %s101, 1
          %s308 = smul.addr %s307, 8
          %s309 = scalar_lea.vmem [#allocation7], %s308
          %310 = dma.done %s306, 128
        $region48: #{tpu_custom_call.1} parent=43 // pred_fallthru
          _
      $region44: #{tpu_custom_call.1} parent=5 // pred_fallthru
        _
    $region6: #{tpu_custom_call.1} parent=1 // loop_footer
      %s21 = sadd.s32 1, %s17
    $region7: #{tpu_custom_call.1} parent=1 // loop_footer_branch
      %16 = sbr.rel target = $region3
    $region8: #{tpu_custom_call.1} parent=1 // loop_exit
      _
    %311 = vsyncpa [#allocation3], 1
    %s312 = scalar_lea.sflag [#allocation3], 1
    %313 = vsyncpa %s312, 1
    %314 = vsyncpa [#allocation6], 1
    %s315 = scalar_lea.sflag [#allocation6], 1
    %316 = vsyncpa %s315, 1
    %317 = vsyncpa [#allocation4], 1
    %s318 = scalar_lea.sflag [#allocation4], 1
    %319 = vsyncpa %s318, 1

</llo_original>
